<compile_context>
chip_gen: v7x
topology: tpu7x:2x2x1
jax: 0.10.0
libtpu: 0.0.40
codegen_flags: <defaults>
</compile_context>

<pallas_src>
from math import sqrt

import jax
import jax.numpy as jnp
from jax import lax
from jax.experimental import pallas as pl
from jax.experimental.pallas import tpu as pltpu


def _cross_attn_kernel(img_ref, qx_ref, wq_ref, bq_ref, wk_ref, bk_ref,
                       wv_ref, bv_ref, out_ref, kT_ref, vT_ref):
    # img_ref : (1, C_vk, Nk)  bf16   one batch element, VK-space image
    # qx_ref  : (1, C_q,  tq)  bf16   one batch element, one query tile
    # w*_ref  : (C_out, C_in)  bf16   1x1-conv weights (1/scale folded into wq)
    # b*_ref  : (C_out, 1)     f32    conv biases (1/scale folded into bq)
    # out_ref : (1, Do, tq)    f32
    # kT_ref  : (E,  Nk)       bf16   VMEM scratch, persists across query tiles
    # vT_ref  : (Do, Nk)       bf16   VMEM scratch, persists across query tiles
    qi = pl.program_id(1)

    # K/V 1x1 convolutions depend only on the image -> compute once per batch
    # element (grid order is batch-outer, query-tile-inner; qi axis is
    # "arbitrary" so this carry is never split across cores).
    @pl.when(qi == 0)
    def _():
        img = img_ref[0]                                                # (C_vk, Nk)
        kT_ref[...] = (jnp.dot(wk_ref[...], img,
                               preferred_element_type=jnp.float32)
                       + bk_ref[...]).astype(kT_ref.dtype)              # (E,  Nk)
        vT_ref[...] = (jnp.dot(wv_ref[...], img,
                               preferred_element_type=jnp.float32)
                       + bv_ref[...]).astype(vT_ref.dtype)              # (Do, Nk)

    # Q projection for this query tile (scale already folded into wq/bq).
    qx = qx_ref[0]                                                      # (C_q, tq)
    qT = jnp.dot(wq_ref[...], qx,
                 preferred_element_type=jnp.float32) + bq_ref[...]      # (E, tq)

    # scores[nk, nq] = sum_e kT[e, nk] * qT[e, nq]
    scores = lax.dot_general(
        kT_ref[...], qT.astype(jnp.bfloat16),
        dimension_numbers=(((0,), (0,)), ((), ())),
        preferred_element_type=jnp.float32)                             # (Nk, tq)

    # softmax over the key axis (torch dim=-2); keep f32, defer the divide.
    m = jnp.max(scores, axis=0, keepdims=True)                          # (1, tq)
    e = jnp.exp(scores - m)                                             # (Nk, tq)
    denom = jnp.sum(e, axis=0, keepdims=True)                           # (1, tq)

    # Unnormalized output, then one per-query reciprocal scale (EUP slot).
    out_un = jnp.dot(vT_ref[...], e.astype(jnp.bfloat16),
                     preferred_element_type=jnp.float32)                # (Do, tq)
    out_ref[0] = (out_un * pl.reciprocal(denom, approx=True)).astype(out_ref.dtype)


def _pick_query_tile(Nq):
    for cand in (512, 256, 128):
        if Nq % cand == 0:
            return cand
    return Nq  # small / ragged query grids: take the whole axis as one block


def conv2d_cross_attention(image, query_space, params, D_emb, tq=None):
    """image: (bs, C_vk, ih, iw) NCHW; query_space: (bs, C_q, bh, bw) NCHW.
    Returns (bs, D_output, bh, bw) NCHW, matching the PyTorch module."""
    bs, c_vk, ih, iw = image.shape
    _, c_q, bh, bw = query_space.shape
    Nk = ih * iw
    Nq = bh * bw
    d_out = params["wv"].shape[0]

    if tq is None:
        tq = _pick_query_tile(Nq)
    assert Nq % tq == 0, (Nq, tq)

    # NCHW -> (bs, C, N) is a pure reshape (no transpose). bf16 inputs halve
    # the HBM traffic into the kernel; accumulation stays f32 inside.
    img = image.reshape(bs, c_vk, Nk).astype(jnp.bfloat16)
    qx = query_space.reshape(bs, c_q, Nq).astype(jnp.bfloat16)

    scale = float(sqrt(D_emb))
    # conv weight (out, in, 1, 1) -> (out, in); fold 1/scale into the Q proj.
    wq = (params["wq"].reshape(D_emb, c_q) / scale).astype(jnp.bfloat16)
    wk = params["wk"].reshape(D_emb, c_vk).astype(jnp.bfloat16)
    wv = params["wv"].reshape(d_out, c_vk).astype(jnp.bfloat16)
    bq = (params["bq"] / scale).reshape(D_emb, 1).astype(jnp.float32)
    bk = params["bk"].reshape(D_emb, 1).astype(jnp.float32)
    bv = params["bv"].reshape(d_out, 1).astype(jnp.float32)

    # NOTE: weight/bias blocks are grid-invariant; they are tiny, so default
    # double-buffering costs only a few KiB of VMEM. The image block only
    # changes with the batch index, so it is not re-DMA'd across query tiles.
    out = pl.pallas_call(
        _cross_attn_kernel,
        out_shape=jax.ShapeDtypeStruct((bs, d_out, Nq), jnp.float32),
        grid_spec=pltpu.PrefetchScalarGridSpec(
            num_scalar_prefetch=0,
            grid=(bs, Nq // tq),
            in_specs=[
                pl.BlockSpec((1, c_vk, Nk), lambda b, qi: (b, 0, 0)),
                pl.BlockSpec((1, c_q, tq), lambda b, qi: (b, 0, qi)),
                pl.BlockSpec((D_emb, c_q), lambda b, qi: (0, 0)),
                pl.BlockSpec((D_emb, 1), lambda b, qi: (0, 0)),
                pl.BlockSpec((D_emb, c_vk), lambda b, qi: (0, 0)),
                pl.BlockSpec((D_emb, 1), lambda b, qi: (0, 0)),
                pl.BlockSpec((d_out, c_vk), lambda b, qi: (0, 0)),
                pl.BlockSpec((d_out, 1), lambda b, qi: (0, 0)),
            ],
            out_specs=pl.BlockSpec((1, d_out, tq), lambda b, qi: (b, 0, qi)),
            scratch_shapes=[
                pltpu.VMEM((D_emb, Nk), jnp.bfloat16),   # cached K^T per batch
                pltpu.VMEM((d_out, Nk), jnp.bfloat16),   # cached V   per batch
            ],
        ),
        compiler_params=pltpu.CompilerParams(
            # batch axis megacore-shardable; query-tile axis must stay
            # sequential because the K/V scratch is carried across it.
            dimension_semantics=("parallel", "arbitrary")),
    )(img, qx, wq, bq, wk, bk, wv, bv)

    # (bs, Do, Nq) -> (bs, Do, bh, bw): pure reshape, no transpose.
    return out.reshape(bs, d_out, bh, bw)


def init_params(key, D_query_space, D_vk_space, D_emb, D_output):
    """Deterministic synthetic init mirroring the module's __init__:
    xavier_uniform_ for conv weights, default Conv2d uniform for biases."""
    ks = jax.random.split(key, 6)

    def xavier(k, out_c, in_c):
        bound = sqrt(6.0 / (in_c + out_c))
        return jax.random.uniform(k, (out_c, in_c, 1, 1), jnp.float32, -bound, bound)

    def bias(k, out_c, in_c):
        bound = 1.0 / sqrt(in_c)
        return jax.random.uniform(k, (out_c,), jnp.float32, -bound, bound)

    return {
        "wq": xavier(ks[0], D_emb, D_query_space),
        "bq": bias(ks[1], D_emb, D_query_space),
        "wk": xavier(ks[2], D_emb, D_vk_space),
        "bk": bias(ks[3], D_emb, D_vk_space),
        "wv": xavier(ks[4], D_output, D_vk_space),
        "bv": bias(ks[5], D_output, D_vk_space),
    }


def reference(image, query_space, params, D_emb):
    """Pure-JAX f32 replica of the PyTorch forward (correctness check)."""
    bs, c_vk, ih, iw = image.shape
    _, c_q, bh, bw = query_space.shape
    d_out = params["wv"].shape[0]
    wq = params["wq"].reshape(D_emb, c_q)
    wk = params["wk"].reshape(D_emb, c_vk)
    wv = params["wv"].reshape(d_out, c_vk)
    q = jnp.einsum("oc,bchw->bohw", wq, query_space) + params["bq"][None, :, None, None]
    k = jnp.einsum("oc,bchw->bohw", wk, image) + params["bk"][None, :, None, None]
    v = jnp.einsum("oc,bchw->bohw", wv, image) + params["bv"][None, :, None, None]
    q = q.reshape(bs, D_emb, bh * bw)
    k = k.reshape(bs, D_emb, ih * iw).transpose(0, 2, 1)
    v = v.reshape(bs, d_out, ih * iw)
    scores = jnp.einsum("bke,beq->bkq", k, q) / sqrt(D_emb)
    weights = jax.nn.softmax(scores, axis=-2)
    out = jnp.einsum("bok,bkq->boq", v, weights)
    return out.reshape(bs, d_out, bh, bw)


if __name__ == "__main__":
    D_query_space, D_vk_space, D_emb, D_output = 4, 6, 32, 8
    bs, bh, bw = 2, 16, 16     # query space spatial  (Nq = 256)
    ih, iw = 8, 8              # VK space spatial     (Nk = 64)

    root = jax.random.PRNGKey(0)
    k_img, k_q, k_par = jax.random.split(root, 3)
    image = jax.random.normal(k_img, (bs, D_vk_space, ih, iw), jnp.float32)
    query_space = jax.random.normal(k_q, (bs, D_query_space, bh, bw), jnp.float32)
    params = init_params(k_par, D_query_space, D_vk_space, D_emb, D_output)

    out = conv2d_cross_attention(image, query_space, params, D_emb)
    out = jax.block_until_ready(out)

    ref = reference(image, query_space, params, D_emb)
    assert out.shape == (bs, D_output, bh, bw), out.shape
    max_err = float(jnp.max(jnp.abs(out - ref)))
    # bf16 MXU operands + approx reciprocal -> ~1e-2 level agreement vs f32 ref.
    assert jnp.allclose(out, ref, atol=5e-2, rtol=5e-2), max_err

    print("KERNEL_OK")
</pallas_src>

<mosaic_0001>
module attributes {stable_mosaic.version = 11 : i64} {
  func.func @_cross_attn_kernel(%arg0: i32, %arg1: i32, %arg2: memref<1x6x64xbf16, #tpu.memory_space<vmem>>, %arg3: memref<1x4x256xbf16, #tpu.memory_space<vmem>>, %arg4: memref<32x4xbf16, #tpu.memory_space<vmem>>, %arg5: memref<32x1xf32, #tpu.memory_space<vmem>>, %arg6: memref<32x6xbf16, #tpu.memory_space<vmem>>, %arg7: memref<32x1xf32, #tpu.memory_space<vmem>>, %arg8: memref<8x6xbf16, #tpu.memory_space<vmem>>, %arg9: memref<8x1xf32, #tpu.memory_space<vmem>>, %arg10: memref<1x8x256xf32, #tpu.memory_space<vmem>>, %arg11: memref<32x64xbf16, #tpu.memory_space<vmem>>, %arg12: memref<8x64xbf16, #tpu.memory_space<vmem>>) attributes {dimension_semantics = [#tpu.dimension_semantics<parallel>, #tpu.dimension_semantics<arbitrary>], iteration_bounds = array<i64: 2, 1>, scalar_prefetch = 0 : i64, scratch_operands = 2 : i64, tpu.core_type = #tpu.core_type<tc>, window_params = [{transform_indices = @transform_0, window_bounds = array<i64: 1, 6, 64>}, {transform_indices = @transform_1, window_bounds = array<i64: 1, 4, 256>}, {pipeline_mode = #tpu.pipeline_mode<synchronous>, transform_indices = @transform_2, window_bounds = array<i64: 32, 4>}, {pipeline_mode = #tpu.pipeline_mode<synchronous>, transform_indices = @transform_3, window_bounds = array<i64: 32, 1>}, {pipeline_mode = #tpu.pipeline_mode<synchronous>, transform_indices = @transform_4, window_bounds = array<i64: 32, 6>}, {pipeline_mode = #tpu.pipeline_mode<synchronous>, transform_indices = @transform_5, window_bounds = array<i64: 32, 1>}, {pipeline_mode = #tpu.pipeline_mode<synchronous>, transform_indices = @transform_6, window_bounds = array<i64: 8, 6>}, {pipeline_mode = #tpu.pipeline_mode<synchronous>, transform_indices = @transform_7, window_bounds = array<i64: 8, 1>}, {transform_indices = @transform_8, window_bounds = array<i64: 1, 8, 256>}]} {
    %c0_i32 = arith.constant 0 : i32
    %0 = arith.cmpi eq, %arg1, %c0_i32 : i32
    %1 = arith.extui %0 : i1 to i32
    %c0_i32_0 = arith.constant 0 : i32
    %2 = arith.cmpi ne, %1, %c0_i32_0 : i32
    scf.if %2 {
      %c0_18 = arith.constant 0 : index
      %c0_19 = arith.constant 0 : index
      %c0_20 = arith.constant 0 : index
      %29 = vector.load %arg2[%c0_18, %c0_19, %c0_20] : memref<1x6x64xbf16, #tpu.memory_space<vmem>>, vector<1x6x64xbf16>
      %30 = vector.shape_cast %29 : vector<1x6x64xbf16> to vector<6x64xbf16>
      %c0_21 = arith.constant 0 : index
      %c0_22 = arith.constant 0 : index
      %31 = vector.load %arg6[%c0_21, %c0_22] : memref<32x6xbf16, #tpu.memory_space<vmem>>, vector<32x6xbf16>
      %cst_23 = arith.constant dense<0.000000e+00> : vector<32x64xf32>
      %32 = tpu.matmul %31, %30, %cst_23 {dimension_numbers = #tpu.dot_dimension_numbers<[1], [0], [0], [1], [0, 0, 1, 1], [], []>} : vector<32x6xbf16>, vector<6x64xbf16>, vector<32x64xf32> -> vector<32x64xf32>
      %c0_24 = arith.constant 0 : index
      %c0_25 = arith.constant 0 : index
      %33 = vector.load %arg7[%c0_24, %c0_25] : memref<32x1xf32, #tpu.memory_space<vmem>>, vector<32x1xf32>
      %34 = vector.broadcast %33 : vector<32x1xf32> to vector<32x64xf32>
      %35 = arith.addf %32, %34 : vector<32x64xf32>
      %36 = arith.truncf %35 : vector<32x64xf32> to vector<32x64xbf16>
      %c0_26 = arith.constant 0 : index
      %c0_27 = arith.constant 0 : index
      %37 = vector.load %arg11[%c0_26, %c0_27] : memref<32x64xbf16, #tpu.memory_space<vmem>>, vector<32x64xbf16>
      tpu.vector_store %arg11[%c0_26, %c0_27], %36 {strides = array<i32>} : memref<32x64xbf16, #tpu.memory_space<vmem>>, vector<32x64xbf16>,
      %c0_28 = arith.constant 0 : index
      %c0_29 = arith.constant 0 : index
      %38 = vector.load %arg8[%c0_28, %c0_29] : memref<8x6xbf16, #tpu.memory_space<vmem>>, vector<8x6xbf16>
      %cst_30 = arith.constant dense<0.000000e+00> : vector<8x64xf32>
      %39 = tpu.matmul %38, %30, %cst_30 {dimension_numbers = #tpu.dot_dimension_numbers<[1], [0], [0], [1], [0, 0, 1, 1], [], []>} : vector<8x6xbf16>, vector<6x64xbf16>, vector<8x64xf32> -> vector<8x64xf32>
      %c0_31 = arith.constant 0 : index
      %c0_32 = arith.constant 0 : index
      %40 = vector.load %arg9[%c0_31, %c0_32] : memref<8x1xf32, #tpu.memory_space<vmem>>, vector<8x1xf32>
      %41 = vector.broadcast %40 : vector<8x1xf32> to vector<8x64xf32>
      %42 = arith.addf %39, %41 : vector<8x64xf32>
      %43 = arith.truncf %42 : vector<8x64xf32> to vector<8x64xbf16>
      %c0_33 = arith.constant 0 : index
      %c0_34 = arith.constant 0 : index
      %44 = vector.load %arg12[%c0_33, %c0_34] : memref<8x64xbf16, #tpu.memory_space<vmem>>, vector<8x64xbf16>
      tpu.vector_store %arg12[%c0_33, %c0_34], %43 {strides = array<i32>} : memref<8x64xbf16, #tpu.memory_space<vmem>>, vector<8x64xbf16>,
    } else {
    }
    %c0 = arith.constant 0 : index
    %c0_1 = arith.constant 0 : index
    %c0_2 = arith.constant 0 : index
    %3 = vector.load %arg3[%c0, %c0_1, %c0_2] : memref<1x4x256xbf16, #tpu.memory_space<vmem>>, vector<1x4x256xbf16>
    %4 = vector.shape_cast %3 : vector<1x4x256xbf16> to vector<4x256xbf16>
    %c0_3 = arith.constant 0 : index
    %c0_4 = arith.constant 0 : index
    %5 = vector.load %arg4[%c0_3, %c0_4] : memref<32x4xbf16, #tpu.memory_space<vmem>>, vector<32x4xbf16>
    %cst = arith.constant dense<0.000000e+00> : vector<32x256xf32>
    %6 = tpu.matmul %5, %4, %cst {dimension_numbers = #tpu.dot_dimension_numbers<[1], [0], [0], [1], [0, 0, 1, 1], [], []>} : vector<32x4xbf16>, vector<4x256xbf16>, vector<32x256xf32> -> vector<32x256xf32>
    %c0_5 = arith.constant 0 : index
    %c0_6 = arith.constant 0 : index
    %7 = vector.load %arg5[%c0_5, %c0_6] : memref<32x1xf32, #tpu.memory_space<vmem>>, vector<32x1xf32>
    %8 = vector.broadcast %7 : vector<32x1xf32> to vector<32x256xf32>
    %9 = arith.addf %6, %8 : vector<32x256xf32>
    %c0_7 = arith.constant 0 : index
    %c0_8 = arith.constant 0 : index
    %10 = vector.load %arg11[%c0_7, %c0_8] : memref<32x64xbf16, #tpu.memory_space<vmem>>, vector<32x64xbf16>
    %11 = arith.truncf %9 : vector<32x256xf32> to vector<32x256xbf16>
    %cst_9 = arith.constant dense<0.000000e+00> : vector<64x256xf32>
    %12 = tpu.matmul %10, %11, %cst_9 {dimension_numbers = #tpu.dot_dimension_numbers<[0], [0], [1], [1], [0, 1, 1, 1], [], []>} : vector<32x64xbf16>, vector<32x256xbf16>, vector<64x256xf32> -> vector<64x256xf32>
    %cst_10 = arith.constant dense<0xFF800000> : vector<256xf32>
    %13 = vector.multi_reduction <maximumf>, %12, %cst_10 [0] : vector<64x256xf32> to vector<256xf32>
    %14 = vector.shape_cast %13 : vector<256xf32> to vector<1x256xf32>
    %15 = vector.broadcast %14 : vector<1x256xf32> to vector<64x256xf32>
    %16 = arith.subf %12, %15 : vector<64x256xf32>
    %17 = math.exp %16 : vector<64x256xf32>
    %cst_11 = arith.constant dense<0.000000e+00> : vector<256xf32>
    %18 = vector.multi_reduction <add>, %17, %cst_11 [0] : vector<64x256xf32> to vector<256xf32>
    %19 = vector.shape_cast %18 : vector<256xf32> to vector<1x256xf32>
    %c0_12 = arith.constant 0 : index
    %c0_13 = arith.constant 0 : index
    %20 = vector.load %arg12[%c0_12, %c0_13] : memref<8x64xbf16, #tpu.memory_space<vmem>>, vector<8x64xbf16>
    %21 = arith.truncf %17 : vector<64x256xf32> to vector<64x256xbf16>
    %cst_14 = arith.constant dense<0.000000e+00> : vector<8x256xf32>
    %22 = tpu.matmul %20, %21, %cst_14 {dimension_numbers = #tpu.dot_dimension_numbers<[1], [0], [0], [1], [0, 0, 1, 1], [], []>} : vector<8x64xbf16>, vector<64x256xbf16>, vector<8x256xf32> -> vector<8x256xf32>
    %23 = tpu.reciprocal %19 {approx = true} : vector<1x256xf32> -> vector<1x256xf32>
    %24 = vector.broadcast %23 : vector<1x256xf32> to vector<8x256xf32>
    %25 = arith.mulf %22, %24 : vector<8x256xf32>
    %c0_15 = arith.constant 0 : index
    %c0_16 = arith.constant 0 : index
    %c0_17 = arith.constant 0 : index
    %26 = vector.load %arg10[%c0_15, %c0_16, %c0_17] : memref<1x8x256xf32, #tpu.memory_space<vmem>>, vector<1x8x256xf32>
    %27 = vector.shape_cast %26 : vector<1x8x256xf32> to vector<8x256xf32>
    %28 = vector.shape_cast %25 : vector<8x256xf32> to vector<1x8x256xf32>
    tpu.vector_store %arg10[%c0_15, %c0_16, %c0_17], %28 {strides = array<i32>} : memref<1x8x256xf32, #tpu.memory_space<vmem>>, vector<1x8x256xf32>,
    return
  }
  func.func @transform_0(%arg0: i32, %arg1: i32) -> (i32, i32, i32) {
    %c0_i32 = arith.constant 0 : i32
    %c0_i32_0 = arith.constant 0 : i32
    %c0_i32_1 = arith.constant 0 : i32
    return %arg0, %c0_i32, %c0_i32_0 : i32, i32, i32
  }
  func.func @transform_1(%arg0: i32, %arg1: i32) -> (i32, i32, i32) {
    %c0_i32 = arith.constant 0 : i32
    %c0_i32_0 = arith.constant 0 : i32
    return %arg0, %c0_i32, %arg1 : i32, i32, i32
  }
  func.func @transform_2(%arg0: i32, %arg1: i32) -> (i32, i32) {
    %c0_i32 = arith.constant 0 : i32
    %c0_i32_0 = arith.constant 0 : i32
    %c0_i32_1 = arith.constant 0 : i32
    return %c0_i32, %c0_i32_0 : i32, i32
  }
  func.func @transform_3(%arg0: i32, %arg1: i32) -> (i32, i32) {
    %c0_i32 = arith.constant 0 : i32
    %c0_i32_0 = arith.constant 0 : i32
    %c0_i32_1 = arith.constant 0 : i32
    return %c0_i32, %c0_i32_0 : i32, i32
  }
  func.func @transform_4(%arg0: i32, %arg1: i32) -> (i32, i32) {
    %c0_i32 = arith.constant 0 : i32
    %c0_i32_0 = arith.constant 0 : i32
    %c0_i32_1 = arith.constant 0 : i32
    return %c0_i32, %c0_i32_0 : i32, i32
  }
  func.func @transform_5(%arg0: i32, %arg1: i32) -> (i32, i32) {
    %c0_i32 = arith.constant 0 : i32
    %c0_i32_0 = arith.constant 0 : i32
    %c0_i32_1 = arith.constant 0 : i32
    return %c0_i32, %c0_i32_0 : i32, i32
  }
  func.func @transform_6(%arg0: i32, %arg1: i32) -> (i32, i32) {
    %c0_i32 = arith.constant 0 : i32
    %c0_i32_0 = arith.constant 0 : i32
    %c0_i32_1 = arith.constant 0 : i32
    return %c0_i32, %c0_i32_0 : i32, i32
  }
  func.func @transform_7(%arg0: i32, %arg1: i32) -> (i32, i32) {
    %c0_i32 = arith.constant 0 : i32
    %c0_i32_0 = arith.constant 0 : i32
    %c0_i32_1 = arith.constant 0 : i32
    return %c0_i32, %c0_i32_0 : i32, i32
  }
  func.func @transform_8(%arg0: i32, %arg1: i32) -> (i32, i32, i32) {
    %c0_i32 = arith.constant 0 : i32
    %c0_i32_0 = arith.constant 0 : i32
    return %arg0, %c0_i32, %arg1 : i32, i32, i32
  }
}

</mosaic_0001>

<llo_original>
// kernel: tpu_custom_call.1
$region0: #{tpu_custom_call.1}
  #allocation0 [shape = 'u32[]', space=smem, size = 0x4, offset = 0x4, fixed_abs, tag = 'smem constant byte address 0x4 - core index']
  #allocation1 [shape = 'u32[144,128]{1,0:T(1,128)}', space=vmem, size = 0x12000, scoped, tag = 'internal scratch']
  #allocation2 [shape = 'bf16[32,64]{1,0:T(16,128)(2,1)}', space=vmem, size = 0x2000, scoped, tag = 'scratch operand']
  #allocation3 [shape = 'bf16[8,64]{1,0:T(8,128)(2,1)}', space=vmem, size = 0x800, scoped, tag = 'scratch operand']
  %s0 = inlined_call_operand.vmem [shape: bf16[2,6,64], index: 0, kind: input, shape index: {}]
  %s1 = inlined_call_operand.vmem [shape: bf16[2,4,256], index: 1, kind: input, shape index: {}]
  %s2 = inlined_call_operand.vmem [shape: bf16[32,4], index: 2, kind: input, shape index: {}]
  %s3 = inlined_call_operand.vmem [shape: f32[32,1], index: 3, kind: input, shape index: {}]
  %s4 = inlined_call_operand.vmem [shape: bf16[32,6], index: 4, kind: input, shape index: {}]
  %s5 = inlined_call_operand.vmem [shape: f32[32,1], index: 5, kind: input, shape index: {}]
  %s6 = inlined_call_operand.vmem [shape: bf16[8,6], index: 6, kind: input, shape index: {}]
  %s7 = inlined_call_operand.vmem [shape: f32[8,1], index: 7, kind: input, shape index: {}]
  %s8 = inlined_call_operand.hbm [shape: f32[2,8,256], index: 8, kind: output, shape index: {}]
  %s9 = sld [smem:[#allocation0]]
  $region69: #{tpu_custom_call.1} parent=0
    _
  %s11 = ssub.s32 1, %s9
  %s12 = scalar_select 0, %s11, %s9
  $region1: #{tpu_custom_call.1} parent=0
    #allocation4 [shape = 'u8[16384]{0}', space=vmem, size = 0x4000, scoped, tag = 'output window, operand 0']
    #allocation5 [shape = 's32[2]{0}', space=sflag, size = 0x8, scoped, tag = 'scoped memory for tpu_custom_call.1']
    %13 = vsyncpa [#allocation5], 0
    %s14 = scalar_lea.sflag [#allocation5], 1
    %15 = vsyncpa %s14, 0
    loop: start=0, step=1, limit=4
    $region2: #{tpu_custom_call.1} parent=1 // loop_pre_header
      _
    $region3: #{tpu_custom_call.1} parent=1 // loop_header
      %s17 = sphi 0, %s21
      %p18 = scmp.ge.s32.totalorder %s17, 4
      %s24 = sphi 0, %s36
      %s25 = sphi 0, %s32
      %s26 = sphi 0, %s24
      %s27 = sphi 0, %s25
      %s28 = sphi 0, %s26
      %s29 = sphi 0, %s27
      %s39 = sphi 0, %s41
      %s42 = sphi 0, %s39
      %s43 = sphi 0, %s42
      %s59 = sphi 0, %s43
      %s67 = sphi 0, %s69
      %s70 = sphi 0, %s67
      %s71 = sphi 0, %s70
      %s87 = sphi 0, %s71
      %s91 = sphi 0, %s91
      %s93 = sphi 0, %s91
      %s94 = sphi 0, %s93
      %s108 = sphi 0, %s94
      %s112 = sphi 0, %s112
      %s114 = sphi 0, %s112
      %s115 = sphi 0, %s114
      %s129 = sphi 0, %s115
      %s133 = sphi 0, %s133
      %s135 = sphi 0, %s133
      %s136 = sphi 0, %s135
      %s150 = sphi 0, %s136
      %s154 = sphi 0, %s154
      %s156 = sphi 0, %s154
      %s157 = sphi 0, %s156
      %s171 = sphi 0, %s157
      %s175 = sphi 0, %s175
      %s177 = sphi 0, %s175
      %s178 = sphi 0, %s177
      %s192 = sphi 0, %s178
      %s196 = sphi 0, %s196
      %s198 = sphi 0, %s196
      %s199 = sphi 0, %s198
      %s213 = sphi 0, %s199
      %s221 = sphi 0, %s223
      %s224 = sphi 0, %s221
      %s225 = sphi 0, %s224
      %s241 = sphi 0, %s225
    $region4: #{tpu_custom_call.1} parent=1 // loop_header_branch
      %20 = sbr.rel (%p18) target = $region8
    $region5: #{tpu_custom_call.1} parent=1 // loop_body
      %s22 = ssub.s32 %s17, 1
      %s23 = ssub.s32 %s17, 2
      %s30 = sadd.s32 1, %s25
      %p31 = scmp.ge.s32.totalorder %s30, 1
      %s32 = scalar_select %p31, 0, %s30
      %s33 = sadd.s32 1, %s24
      %s34 = scalar_select %p31, %s33, %s24
      %p35 = scmp.ge.s32.totalorder %s34, 2
      %s36 = scalar_select %p35, 0, %s34
      %s37 = ssub.s32 %s24, %s36
      %p38 = scmp.eq.s32.totalorder %s37, 0
      %s40 = sadd.s32 %s39, 1
      %s41 = scalar_select %p38, %s39, %s40
      %p44 = pneg %p38
      %p45 = scmp.eq.s32.totalorder %s17, 1
      %p46 = por %p44, %p45
      %p47 = scmp.ne.s32.totalorder %s39, %s42
      %p48 = scmp.eq.s32.totalorder %s17, 0
      %p49 = por %p47, %p48
      %p50 = scmp.ne.s32.totalorder %s39, %s42
      %p51 = scmp.eq.s32.totalorder %s22, 1
      %p52 = por %p50, %p51
      %p53 = scmp.ne.s32.totalorder %s42, %s43
      %p54 = scmp.eq.s32.totalorder %s22, 0
      %p55 = por %p53, %p54
      %p56 = scmp.ne.s32.totalorder %s42, %s43
      %p57 = scmp.eq.s32.totalorder %s23, 1
      %p58 = por %p56, %p57
      %p60 = scmp.ne.s32.totalorder %s43, %s59
      %p61 = scmp.eq.s32.totalorder %s23, 0
      %p62 = por %p60, %p61
      %s63 = ssub.s32 %s24, %s36
      %s64 = ssub.s32 %s25, %s32
      %s65 = sor.u32 %s63, %s64
      %p66 = scmp.eq.s32.totalorder %s65, 0
      %s68 = sadd.s32 %s67, 1
      %s69 = scalar_select %p66, %s67, %s68
      %p72 = pneg %p66
      %p73 = scmp.eq.s32.totalorder %s17, 1
      %p74 = por %p72, %p73
      %p75 = scmp.ne.s32.totalorder %s67, %s70
      %p76 = scmp.eq.s32.totalorder %s17, 0
      %p77 = por %p75, %p76
      %p78 = scmp.ne.s32.totalorder %s67, %s70
      %p79 = scmp.eq.s32.totalorder %s22, 1
      %p80 = por %p78, %p79
      %p81 = scmp.ne.s32.totalorder %s70, %s71
      %p82 = scmp.eq.s32.totalorder %s22, 0
      %p83 = por %p81, %p82
      %p84 = scmp.ne.s32.totalorder %s70, %s71
      %p85 = scmp.eq.s32.totalorder %s23, 1
      %p86 = por %p84, %p85
      %p88 = scmp.ne.s32.totalorder %s71, %s87
      %p89 = scmp.eq.s32.totalorder %s23, 0
      %p90 = por %p88, %p89
      %s92 = sadd.s32 %s91, 1
      %p95 = scmp.eq.s32.totalorder %s17, 1
      %p96 = scmp.ne.s32.totalorder %s91, %s93
      %p97 = scmp.eq.s32.totalorder %s17, 0
      %p98 = por %p96, %p97
      %p99 = scmp.ne.s32.totalorder %s91, %s93
      %p100 = scmp.eq.s32.totalorder %s22, 1
      %p101 = por %p99, %p100
      %p102 = scmp.ne.s32.totalorder %s93, %s94
      %p103 = scmp.eq.s32.totalorder %s22, 0
      %p104 = por %p102, %p103
      %p105 = scmp.ne.s32.totalorder %s93, %s94
      %p106 = scmp.eq.s32.totalorder %s23, 1
      %p107 = por %p105, %p106
      %p109 = scmp.ne.s32.totalorder %s94, %s108
      %p110 = scmp.eq.s32.totalorder %s23, 0
      %p111 = por %p109, %p110
      %s113 = sadd.s32 %s112, 1
      %p116 = scmp.eq.s32.totalorder %s17, 1
      %p117 = scmp.ne.s32.totalorder %s112, %s114
      %p118 = scmp.eq.s32.totalorder %s17, 0
      %p119 = por %p117, %p118
      %p120 = scmp.ne.s32.totalorder %s112, %s114
      %p121 = scmp.eq.s32.totalorder %s22, 1
      %p122 = por %p120, %p121
      %p123 = scmp.ne.s32.totalorder %s114, %s115
      %p124 = scmp.eq.s32.totalorder %s22, 0
      %p125 = por %p123, %p124
      %p126 = scmp.ne.s32.totalorder %s114, %s115
      %p127 = scmp.eq.s32.totalorder %s23, 1
      %p128 = por %p126, %p127
      %p130 = scmp.ne.s32.totalorder %s115, %s129
      %p131 = scmp.eq.s32.totalorder %s23, 0
      %p132 = por %p130, %p131
      %s134 = sadd.s32 %s133, 1
      %p137 = scmp.eq.s32.totalorder %s17, 1
      %p138 = scmp.ne.s32.totalorder %s133, %s135
      %p139 = scmp.eq.s32.totalorder %s17, 0
      %p140 = por %p138, %p139
      %p141 = scmp.ne.s32.totalorder %s133, %s135
      %p142 = scmp.eq.s32.totalorder %s22, 1
      %p143 = por %p141, %p142
      %p144 = scmp.ne.s32.totalorder %s135, %s136
      %p145 = scmp.eq.s32.totalorder %s22, 0
      %p146 = por %p144, %p145
      %p147 = scmp.ne.s32.totalorder %s135, %s136
      %p148 = scmp.eq.s32.totalorder %s23, 1
      %p149 = por %p147, %p148
      %p151 = scmp.ne.s32.totalorder %s136, %s150
      %p152 = scmp.eq.s32.totalorder %s23, 0
      %p153 = por %p151, %p152
      %s155 = sadd.s32 %s154, 1
      %p158 = scmp.eq.s32.totalorder %s17, 1
      %p159 = scmp.ne.s32.totalorder %s154, %s156
      %p160 = scmp.eq.s32.totalorder %s17, 0
      %p161 = por %p159, %p160
      %p162 = scmp.ne.s32.totalorder %s154, %s156
      %p163 = scmp.eq.s32.totalorder %s22, 1
      %p164 = por %p162, %p163
      %p165 = scmp.ne.s32.totalorder %s156, %s157
      %p166 = scmp.eq.s32.totalorder %s22, 0
      %p167 = por %p165, %p166
      %p168 = scmp.ne.s32.totalorder %s156, %s157
      %p169 = scmp.eq.s32.totalorder %s23, 1
      %p170 = por %p168, %p169
      %p172 = scmp.ne.s32.totalorder %s157, %s171
      %p173 = scmp.eq.s32.totalorder %s23, 0
      %p174 = por %p172, %p173
      %s176 = sadd.s32 %s175, 1
      %p179 = scmp.eq.s32.totalorder %s17, 1
      %p180 = scmp.ne.s32.totalorder %s175, %s177
      %p181 = scmp.eq.s32.totalorder %s17, 0
      %p182 = por %p180, %p181
      %p183 = scmp.ne.s32.totalorder %s175, %s177
      %p184 = scmp.eq.s32.totalorder %s22, 1
      %p185 = por %p183, %p184
      %p186 = scmp.ne.s32.totalorder %s177, %s178
      %p187 = scmp.eq.s32.totalorder %s22, 0
      %p188 = por %p186, %p187
      %p189 = scmp.ne.s32.totalorder %s177, %s178
      %p190 = scmp.eq.s32.totalorder %s23, 1
      %p191 = por %p189, %p190
      %p193 = scmp.ne.s32.totalorder %s178, %s192
      %p194 = scmp.eq.s32.totalorder %s23, 0
      %p195 = por %p193, %p194
      %s197 = sadd.s32 %s196, 1
      %p200 = scmp.eq.s32.totalorder %s17, 1
      %p201 = scmp.ne.s32.totalorder %s196, %s198
      %p202 = scmp.eq.s32.totalorder %s17, 0
      %p203 = por %p201, %p202
      %p204 = scmp.ne.s32.totalorder %s196, %s198
      %p205 = scmp.eq.s32.totalorder %s22, 1
      %p206 = por %p204, %p205
      %p207 = scmp.ne.s32.totalorder %s198, %s199
      %p208 = scmp.eq.s32.totalorder %s22, 0
      %p209 = por %p207, %p208
      %p210 = scmp.ne.s32.totalorder %s198, %s199
      %p211 = scmp.eq.s32.totalorder %s23, 1
      %p212 = por %p210, %p211
      %p214 = scmp.ne.s32.totalorder %s199, %s213
      %p215 = scmp.eq.s32.totalorder %s23, 0
      %p216 = por %p214, %p215
      %s217 = ssub.s32 %s24, %s36
      %s218 = ssub.s32 %s25, %s32
      %s219 = sor.u32 %s217, %s218
      %p220 = scmp.eq.s32.totalorder %s219, 0
      %s222 = sadd.s32 %s221, 1
      %s223 = scalar_select %p220, %s221, %s222
      %p226 = pneg %p220
      %p227 = scmp.eq.s32.totalorder %s17, 1
      %p228 = por %p226, %p227
      %p229 = scmp.ne.s32.totalorder %s221, %s224
      %p230 = scmp.eq.s32.totalorder %s17, 0
      %p231 = por %p229, %p230
      %p232 = scmp.ne.s32.totalorder %s221, %s224
      %p233 = scmp.eq.s32.totalorder %s22, 1
      %p234 = por %p232, %p233
      %p235 = scmp.ne.s32.totalorder %s224, %s225
      %p236 = scmp.eq.s32.totalorder %s22, 0
      %p237 = por %p235, %p236
      %p238 = scmp.ne.s32.totalorder %s224, %s225
      %p239 = scmp.eq.s32.totalorder %s23, 1
      %p240 = por %p238, %p239
      %p242 = scmp.ne.s32.totalorder %s225, %s241
      %p243 = scmp.eq.s32.totalorder %s23, 0
      %p244 = por %p242, %p243
      %p245 = scmp.le.s32.totalorder 1, %s17
      %p246 = scmp.lt.s32.totalorder %s17, 3
      %p247 = pnand %p245, %p246
      %p248 = pneg %p247
      // Predicated region
      $region9: #{tpu_custom_call.1} parent=5 // pred_check
        _
      $region10: #{tpu_custom_call.1} parent=5 // pred_check_branch
        %250 = sbr.rel (%p247) target = $region12
      $region11: #{tpu_custom_call.1} parent=5 // pred_region
        %s251 = ssub.s32 %s17, 1
        // Predicated region
        $region13: #{tpu_custom_call.1} parent=11 // pred_check
          %p252 = pneg %p104
        $region14: #{tpu_custom_call.1} parent=11 // pred_check_branch
          %254 = sbr.rel (%p252) target = $region16
        $region15: #{tpu_custom_call.1} parent=11 // pred_region
          _
        $region16: #{tpu_custom_call.1} parent=11 // pred_fallthru
          _
        // Predicated region
        $region17: #{tpu_custom_call.1} parent=11 // pred_check
          %p255 = pneg %p125
        $region18: #{tpu_custom_call.1} parent=11 // pred_check_branch
          %257 = sbr.rel (%p255) target = $region20
        $region19: #{tpu_custom_call.1} parent=11 // pred_region
          _
        $region20: #{tpu_custom_call.1} parent=11 // pred_fallthru
          _
        // Predicated region
        $region21: #{tpu_custom_call.1} parent=11 // pred_check
          %p258 = pneg %p146
        $region22: #{tpu_custom_call.1} parent=11 // pred_check_branch
          %260 = sbr.rel (%p258) target = $region24
        $region23: #{tpu_custom_call.1} parent=11 // pred_region
          _
        $region24: #{tpu_custom_call.1} parent=11 // pred_fallthru
          _
        // Predicated region
        $region25: #{tpu_custom_call.1} parent=11 // pred_check
          %p261 = pneg %p167
        $region26: #{tpu_custom_call.1} parent=11 // pred_check_branch
          %263 = sbr.rel (%p261) target = $region28
        $region27: #{tpu_custom_call.1} parent=11 // pred_region
          _
        $region28: #{tpu_custom_call.1} parent=11 // pred_fallthru
          _
        // Predicated region
        $region29: #{tpu_custom_call.1} parent=11 // pred_check
          %p264 = pneg %p188
        $region30: #{tpu_custom_call.1} parent=11 // pred_check_branch
          %266 = sbr.rel (%p264) target = $region32
        $region31: #{tpu_custom_call.1} parent=11 // pred_region
          _
        $region32: #{tpu_custom_call.1} parent=11 // pred_fallthru
          _
        // Predicated region
        $region33: #{tpu_custom_call.1} parent=11 // pred_check
          %p267 = pneg %p209
        $region34: #{tpu_custom_call.1} parent=11 // pred_check_branch
          %269 = sbr.rel (%p267) target = $region36
        $region35: #{tpu_custom_call.1} parent=11 // pred_region
          _
        $region36: #{tpu_custom_call.1} parent=11 // pred_fallthru
          _
      $region12: #{tpu_custom_call.1} parent=5 // pred_fallthru
        _
      %p270 = scmp.lt.s32.totalorder %s17, 2
      // Predicated region
      $region37: #{tpu_custom_call.1} parent=5 // pred_check
        %p271 = pneg %p270
      $region38: #{tpu_custom_call.1} parent=5 // pred_check_branch
        %273 = sbr.rel (%p271) target = $region40
      $region39: #{tpu_custom_call.1} parent=5 // pred_region
        // Predicated region
        $region41: #{tpu_custom_call.1} parent=39 // pred_check
          %p274 = pneg %p49
        $region42: #{tpu_custom_call.1} parent=39 // pred_check_branch
          %276 = sbr.rel (%p274) target = $region44
        $region43: #{tpu_custom_call.1} parent=39 // pred_region
          %p277 = scmp.lt.s32.totalorder %s24, 1
          %s278 = scalar_select %p277, %s24, 1
          %s279 = smul.addr %s278, 4
          %s280 = scalar_lea.vmem %s0, %s279
        $region44: #{tpu_custom_call.1} parent=39 // pred_fallthru
          _
        // Predicated region
        $region45: #{tpu_custom_call.1} parent=39 // pred_check
          %p281 = pneg %p77
        $region46: #{tpu_custom_call.1} parent=39 // pred_check_branch
          %283 = sbr.rel (%p281) target = $region48
        $region47: #{tpu_custom_call.1} parent=39 // pred_region
          %s284 = smul.u32 2, %s25
          %p285 = scmp.lt.s32.totalorder %s24, 1
          %s286 = scalar_select %p285, %s24, 1
          %p287 = scmp.lt.s32.totalorder %s284, 1
          %s288 = scalar_select %p287, %s284, 1
          %s289 = smul.addr %s286, 2
          %s290 = sadd.s32 %s288, %s289
          %s291 = smul.addr %s290, 2
          %s292 = scalar_lea.vmem %s1, %s291
          %s293 = smul.u32 2, %s25
        $region48: #{tpu_custom_call.1} parent=39 // pred_fallthru
          _
      $region40: #{tpu_custom_call.1} parent=5 // pred_fallthru
        _
      %p294 = scmp.le.s32.totalorder 1, %s17
      %p295 = scmp.lt.s32.totalorder %s17, 3
      %p296 = pnand %p294, %p295
      %p297 = pneg %p296
      // Predicated region
      $region49: #{tpu_custom_call.1} parent=5 // pred_check
        _
      $region50: #{tpu_custom_call.1} parent=5 // pred_check_branch
        %299 = sbr.rel (%p296) target = $region52
      $region51: #{tpu_custom_call.1} parent=5 // pred_region
        %s300 = ssub.s32 %s17, 1
        %p301 = scmp.lt.s32.totalorder %s26, 1
        %s302 = scalar_select %p301, %s26, 1
        %s303 = smul.addr %s302, 4
        %s304 = scalar_lea.vmem %s0, %s303
        %p305 = pneg %p55
        %p306 = pneg %p52
        %s307 = smul.u32 2, %s27
        %p308 = scmp.lt.s32.totalorder %s26, 1
        %s309 = scalar_select %p308, %s26, 1
        %p310 = scmp.lt.s32.totalorder %s307, 1
        %s311 = scalar_select %p310, %s307, 1
        %s312 = smul.addr %s309, 2
        %s313 = sadd.s32 %s311, %s312
        %s314 = smul.addr %s313, 2
        %s315 = scalar_lea.vmem %s1, %s314
        %p316 = pneg %p83
        %p317 = pneg %p80
        %p318 = pneg %p104
        %p319 = pneg %p101
        %p320 = pneg %p125
        %p321 = pneg %p122
        %p322 = pneg %p146
        %p323 = pneg %p143
        %p324 = pneg %p167
        %p325 = pneg %p164
        %p326 = pneg %p188
        %p327 = pneg %p185
        %p328 = pneg %p209
        %p329 = pneg %p206
        %p330 = pneg %p237
        %p331 = pneg %p234
        %s332 = sand.u32 %s224, 1
        %s333 = scalar_lea.sflag [#allocation5], %s332
        %s334 = sand.u32 %s224, 1
        %s335 = smul.addr %s334, 16
        %s336 = scalar_lea.vmem [#allocation4], %s335
        %p337 = scmp.lt.s32.totalorder %s26, 1
        %s338 = scalar_select %p337, %s26, 1
        %s339 = smul.addr %s338, 4
        %s340 = scalar_lea.vmem %s0, %s339
        %s341 = smul.u32 2, %s27
        %p342 = scmp.lt.s32.totalorder %s26, 1
        %s343 = scalar_select %p342, %s26, 1
        %p344 = scmp.lt.s32.totalorder %s341, 1
        %s345 = scalar_select %p344, %s341, 1
        %s346 = smul.addr %s343, 2
        %s347 = sadd.s32 %s345, %s346
        %s348 = smul.addr %s347, 2
        %s349 = scalar_lea.vmem %s1, %s348
        %s350 = smul.u32 2, %s27
        %s351 = smul.u32 2, %s27
        %p353 = scmp.eq.s32.totalorder %s27, 0
        // Predicated region
        $region53: #{tpu_custom_call.1} parent=51 // pred_check
          %p354 = pneg %p353
        $region54: #{tpu_custom_call.1} parent=51 // pred_check_branch
          %356 = sbr.rel (%p354) target = $region56
        $region55: #{tpu_custom_call.1} parent=51 // pred_region
          %v357 = vld [vmem:[%s340] sm:$0x7]
          %v358 = vld [vmem:[%s4] sm:$0xf]
          %v359 = vld [vmem:[%s4 + $0x4] sm:$0xf]
          %v360 = vld [vmem:[%s4 + $0x8] sm:$0xf]
          %v361 = vld [vmem:[%s4 + $0xc] sm:$0xf]
          %v362 = vld [vmem:[%s5] sm:$0xff]
          %v363 = vld [vmem:[%s5 + $0x8] sm:$0xff]
          %v364 = vld [vmem:[%s5 + $0x10] sm:$0xff]
          %v365 = vld [vmem:[%s5 + $0x18] sm:$0xff]
          %367 = vset.pattern.permute.xlu0 0
          %368 = vperm.xlu0 %367, %v362
          %v369 = vpop.permute.xlu0 %368
          %372 = vset.pattern.permute.xlu0 0
          %373 = vperm.xlu0 %372, %v363
          %v374 = vpop.permute.xlu0 %373
          %377 = vset.pattern.permute.xlu0 0
          %378 = vperm.xlu0 %377, %v364
          %v379 = vpop.permute.xlu0 %378
          %382 = vset.pattern.permute.xlu0 0
          %383 = vperm.xlu0 %382, %v365
          %v384 = vpop.permute.xlu0 %383
          %v390 = vunpack.c.l.b16 %v358
          %v391 = vunpack.c.l.b16 %v359
          %v392 = vunpack.c.l.b16 %v360
          %v393 = vunpack.c.l.b16 %v361
          %v394 = vpack.c.b16 %v391, %v390
          %v395 = vpack.c.b16 %v393, %v392
          %vm396 = vcmask 48128
          %v398 = vsel %vm396, %v394, 0
          %v401 = vsel %vm396, %v395, 0
          %vm403 = vcmask 1042432
          %v405 = vsel %vm403, %v357, 0
          %407 = vmatprep.subr.bf16.mxu0 0
          %408 = vmatpush1.bf16.msra.mxu0 %v405
          %409 = vmatprep.subr.bf16.mxu0 0
          %410 = vmatpush1.bf16.msra.mxu0 0
          %411 = vmatprep.subr.bf16.mxu0 0
          %412 = vmatpush1.bf16.msra.mxu0 0
          %413 = vmatprep.subr.bf16.mxu0 0
          %414 = vmatpush1.bf16.msra.mxu0 0
          %415 = vmatprep.subr.bf16.mxu0 0
          %416 = vmatpush1.bf16.msra.mxu0 0
          %417 = vmatprep.subr.bf16.mxu0 0
          %418 = vmatpush1.bf16.msra.mxu0 0
          %419 = vmatprep.subr.bf16.mxu0 0
          %420 = vmatpush1.bf16.msra.mxu0 0
          %421 = vmatprep.subr.bf16.mxu0 0
          %422 = vmatpush1.bf16.msra.mxu0 0
          %423 = vmatprep.subr.bf16.mxu0 0
          %424 = vmatpush1.bf16.msra.mxu0 0
          %425 = vmatprep.subr.bf16.mxu0 0
          %426 = vmatpush1.bf16.msra.mxu0 0
          %427 = vmatprep.subr.bf16.mxu0 0
          %428 = vmatpush1.bf16.msra.mxu0 0
          %429 = vmatprep.subr.bf16.mxu0 0
          %430 = vmatpush1.bf16.msra.mxu0 0
          %431 = vmatprep.subr.bf16.mxu0 0
          %432 = vmatpush1.bf16.msra.mxu0 0
          %433 = vmatprep.subr.bf16.mxu0 0
          %434 = vmatpush1.bf16.msra.mxu0 0
          %435 = vmatprep.subr.bf16.mxu0 0
          %436 = vmatpush1.bf16.msra.mxu0 0
          %437 = vmatprep.subr.bf16.mxu0 0
          %438 = vmatpush1.bf16.msra.mxu0 0
          %439 = vmatprep.mubr.bf16.mxu0 0
          %440 = vmatmul.mubr.bf16.gmra.mrb[0].mxu0 %v398
          %v441 = vpop.f32.mrb[0].mxu0
          %v442 = vadd.f32 %v369, %v441
          %v443 = vpop.f32.mrb[0].mxu0
          %v444 = vpop.f32.mrb[0].mxu0
          %v445 = vadd.f32 %v374, %v444
          %v446 = vpop.f32.mrb[0].mxu0
          %447 = vmatprep.mubr.bf16.mxu0 0
          %448 = vmatmul.mubr.bf16.gmra.mrb[0].mxu0 %v401
          %v449 = vpop.f32.mrb[0].mxu0
          %v450 = vadd.f32 %v379, %v449
          %v451 = vpop.f32.mrb[0].mxu0
          %v452 = vpop.f32.mrb[0].mxu0
          %v453 = vadd.f32 %v384, %v452
          %v454 = vpop.f32.mrb[0].mxu0
          %455 = vdwg.mxu0
          %v456 = vpack.c.bf16 %v445, %v442
          %v457 = vpack.c.bf16 %v453, %v450
          %vm458 = vcmask 523264
          %459 = vst.msk [vmem:[#allocation2] sm:$0xff] %vm458, %v456
          %460 = vst.msk [vmem:[#allocation2 + $0x8] sm:$0xff] %vm458, %v457
          %v461 = vld [vmem:[%s6] sm:$0xf]
          %v462 = vld [vmem:[%s7] sm:$0xff]
          %464 = vset.pattern.permute.xlu0 0
          %465 = vperm.xlu0 %464, %v462
          %v466 = vpop.permute.xlu0 %465
          %v469 = vsel %vm396, %v461, 0
          %471 = vmatprep.subr.bf16.mxu0 0
          %472 = vmatpush1.bf16.msra.mxu0 %v405
          %473 = vmatprep.subr.bf16.mxu0 0
          %474 = vmatpush1.bf16.msra.mxu0 0
          %475 = vmatprep.subr.bf16.mxu0 0
          %476 = vmatpush1.bf16.msra.mxu0 0
          %477 = vmatprep.subr.bf16.mxu0 0
          %478 = vmatpush1.bf16.msra.mxu0 0
          %479 = vmatprep.subr.bf16.mxu0 0
          %480 = vmatpush1.bf16.msra.mxu0 0
          %481 = vmatprep.subr.bf16.mxu0 0
          %482 = vmatpush1.bf16.msra.mxu0 0
          %483 = vmatprep.subr.bf16.mxu0 0
          %484 = vmatpush1.bf16.msra.mxu0 0
          %485 = vmatprep.subr.bf16.mxu0 0
          %486 = vmatpush1.bf16.msra.mxu0 0
          %487 = vmatprep.subr.bf16.mxu0 0
          %488 = vmatpush1.bf16.msra.mxu0 0
          %489 = vmatprep.subr.bf16.mxu0 0
          %490 = vmatpush1.bf16.msra.mxu0 0
          %491 = vmatprep.subr.bf16.mxu0 0
          %492 = vmatpush1.bf16.msra.mxu0 0
          %493 = vmatprep.subr.bf16.mxu0 0
          %494 = vmatpush1.bf16.msra.mxu0 0
          %495 = vmatprep.subr.bf16.mxu0 0
          %496 = vmatpush1.bf16.msra.mxu0 0
          %497 = vmatprep.subr.bf16.mxu0 0
          %498 = vmatpush1.bf16.msra.mxu0 0
          %499 = vmatprep.subr.bf16.mxu0 0
          %500 = vmatpush1.bf16.msra.mxu0 0
          %501 = vmatprep.subr.bf16.mxu0 0
          %502 = vmatpush1.bf16.msra.mxu0 0
          %503 = vmatprep.mubr.bf16.mxu0 0
          %504 = vmatmul.mubr.bf16.gmra.mrb[0].mxu0 %v469
          %v505 = vpop.f32.mrb[0].mxu0
          %v506 = vadd.f32 %v466, %v505
          %v507 = vpop.f32.mrb[0].mxu0
          %v508 = vpop.f32.mrb[0].mxu0
          %v509 = vpop.f32.mrb[0].mxu0
          %510 = vdwg.mxu0
          %v511 = vpack.c.bf16 %v506, %v506
          %vm512 = vcmask 519168
          %513 = vst.msk [vmem:[#allocation3] sm:$0xf] %vm512, %v511
        $region56: #{tpu_custom_call.1} parent=51 // pred_fallthru
          _
        %v514 = vld [vmem:[%s349] sm:$0xf]
        %v515 = vld [vmem:[%s2] sm:$0xf]
        %v516 = vld [vmem:[%s2 + $0x4] sm:$0xf]
        %v517 = vld [vmem:[%s2 + $0x8] sm:$0xf]
        %v518 = vld [vmem:[%s2 + $0xc] sm:$0xf]
        %v519 = vld [vmem:[%s3] sm:$0xff]
        %v520 = vld [vmem:[%s3 + $0x8] sm:$0xff]
        %v521 = vld [vmem:[%s3 + $0x10] sm:$0xff]
        %v522 = vld [vmem:[%s3 + $0x18] sm:$0xff]
        %524 = vset.pattern.permute.xlu0 0
        %525 = vperm.xlu0 %524, %v519
        %v526 = vpop.permute.xlu0 %525
        %529 = vset.pattern.permute.xlu0 0
        %530 = vperm.xlu0 %529, %v520
        %v531 = vpop.permute.xlu0 %530
        %534 = vset.pattern.permute.xlu0 0
        %535 = vperm.xlu0 %534, %v521
        %v536 = vpop.permute.xlu0 %535
        %539 = vset.pattern.permute.xlu0 0
        %540 = vperm.xlu0 %539, %v522
        %v541 = vpop.permute.xlu0 %540
        %v547 = vunpack.c.l.b16 %v515
        %v548 = vunpack.c.l.b16 %v516
        %v549 = vunpack.c.l.b16 %v517
        %v550 = vunpack.c.l.b16 %v518
        %v551 = vpack.c.b16 %v548, %v547
        %v552 = vpack.c.b16 %v550, %v549
        %v555 = vunpack.c.l.s4 1983009808
        %v556 = vunpack.c.0.s8 %v555
        %v557 = vlaneseq
        %v558 = vshrl.u32 %v557, 7
        %v559 = vsub.s32 %v556, %v558
        %v560 = vrot.slane %v514, %v559
        %v561 = vcombine.high %v560, %v560
        %vm562 = vcmask 31744
        %v564 = vsel %vm562, %v551, 0
        %v567 = vsel %vm562, %v552, 0
        %vm569 = vcmask 1041408
        %v571 = vsel %vm569, %v560, 0
        %v574 = vsel %vm569, %v561, 0
        %576 = vmatprep.subr.bf16.mxu0 %v574
        %577 = vmatpush1.bf16.msra.mxu0 %v571
        %578 = vmatprep.subr.bf16.mxu0 0
        %579 = vmatpush1.bf16.msra.mxu0 0
        %580 = vmatprep.subr.bf16.mxu0 0
        %581 = vmatpush1.bf16.msra.mxu0 0
        %582 = vmatprep.subr.bf16.mxu0 0
        %583 = vmatpush1.bf16.msra.mxu0 0
        %584 = vmatprep.subr.bf16.mxu0 0
        %585 = vmatpush1.bf16.msra.mxu0 0
        %586 = vmatprep.subr.bf16.mxu0 0
        %587 = vmatpush1.bf16.msra.mxu0 0
        %588 = vmatprep.subr.bf16.mxu0 0
        %589 = vmatpush1.bf16.msra.mxu0 0
        %590 = vmatprep.subr.bf16.mxu0 0
        %591 = vmatpush1.bf16.msra.mxu0 0
        %592 = vmatprep.subr.bf16.mxu0 0
        %593 = vmatpush1.bf16.msra.mxu0 0
        %594 = vmatprep.subr.bf16.mxu0 0
        %595 = vmatpush1.bf16.msra.mxu0 0
        %596 = vmatprep.subr.bf16.mxu0 0
        %597 = vmatpush1.bf16.msra.mxu0 0
        %598 = vmatprep.subr.bf16.mxu0 0
        %599 = vmatpush1.bf16.msra.mxu0 0
        %600 = vmatprep.subr.bf16.mxu0 0
        %601 = vmatpush1.bf16.msra.mxu0 0
        %602 = vmatprep.subr.bf16.mxu0 0
        %603 = vmatpush1.bf16.msra.mxu0 0
        %604 = vmatprep.subr.bf16.mxu0 0
        %605 = vmatpush1.bf16.msra.mxu0 0
        %606 = vmatprep.subr.bf16.mxu0 0
        %607 = vmatpush1.bf16.msra.mxu0 0
        %608 = vmatprep.mubr.bf16.mxu0 0
        %609 = vmatmul.mubr.bf16.gmra.mrb[0].mxu0 %v564
        %v610 = vpop.f32.mrb[0].mxu0
        %v611 = vadd.f32 %v526, %v610
        %v612 = vpop.f32.mrb[0].mxu0
        %v613 = vadd.f32 %v526, %v612
        %v614 = vpop.f32.mrb[0].mxu0
        %v615 = vadd.f32 %v531, %v614
        %v616 = vpop.f32.mrb[0].mxu0
        %v617 = vadd.f32 %v531, %v616
        %618 = vmatprep.mubr.bf16.mxu0 0
        %619 = vmatmul.mubr.bf16.gmra.mrb[0].mxu0 %v567
        %v620 = vpop.f32.mrb[0].mxu0
        %v621 = vadd.f32 %v536, %v620
        %v622 = vpop.f32.mrb[0].mxu0
        %v623 = vadd.f32 %v536, %v622
        %v624 = vpop.f32.mrb[0].mxu0
        %v625 = vadd.f32 %v541, %v624
        %v626 = vpop.f32.mrb[0].mxu0
        %v627 = vadd.f32 %v541, %v626
        %628 = vdwg.mxu0
        %v629 = vld [vmem:[#allocation2] sm:$0xff]
        %v630 = vld [vmem:[#allocation2 + $0x8] sm:$0xff]
        %v631 = vpack.c.bf16 %v615, %v611
        %v632 = vpack.c.bf16 %v617, %v613
        %v633 = vpack.c.bf16 %v625, %v621
        %v634 = vpack.c.bf16 %v627, %v623
        %635 = vxpose.xlu0.c.b16.start [1/8] %v629, 128
        %636 = vxpose.xlu0.c.b16.cont [2/8] %v630, 128
        %637 = vxpose.xlu0.c.b16.cont [3/8] 0, 128
        %638 = vxpose.xlu0.c.b16.cont [4/8] 0, 128
        %639 = vxpose.xlu0.c.b16.cont [5/8] 0, 128
        %640 = vxpose.xlu0.c.b16.cont [6/8] 0, 128
        %641 = vxpose.xlu0.c.b16.cont [7/8] 0, 128
        %642 = vxpose.xlu0.c.b16.end [8/8] 0, 128
        %v643 = vpop.trf.xlu0
        %v644 = vpop.trf.xlu0
        %v645 = vpop.trf.xlu0
        %v646 = vpop.trf.xlu0
        %v647 = vpop.trf.xlu0
        %v648 = vpop.trf.xlu0
        %v649 = vpop.trf.xlu0
        %v650 = vpop.trf.xlu0
        %vm651 = vcmask 261120
        %v653 = vsel %vm651, %v643, 0
        %v656 = vsel %vm651, %v644, 0
        %v659 = vsel %vm651, %v645, 0
        %v662 = vsel %vm651, %v646, 0
        %664 = vmatprep.subr.bf16.mxu0 %v632
        %665 = vmatpush1.bf16.msra.mxu0 %v631
        %666 = vmatprep.subr.bf16.mxu0 %v634
        %667 = vmatpush1.bf16.msra.mxu0 %v633
        %668 = vmatprep.subr.bf16.mxu0 0
        %669 = vmatpush1.bf16.msra.mxu0 0
        %670 = vmatprep.subr.bf16.mxu0 0
        %671 = vmatpush1.bf16.msra.mxu0 0
        %672 = vmatprep.subr.bf16.mxu0 0
        %673 = vmatpush1.bf16.msra.mxu0 0
        %674 = vmatprep.subr.bf16.mxu0 0
        %675 = vmatpush1.bf16.msra.mxu0 0
        %676 = vmatprep.subr.bf16.mxu0 0
        %677 = vmatpush1.bf16.msra.mxu0 0
        %678 = vmatprep.subr.bf16.mxu0 0
        %679 = vmatpush1.bf16.msra.mxu0 0
        %680 = vmatprep.subr.bf16.mxu0 0
        %681 = vmatpush1.bf16.msra.mxu0 0
        %682 = vmatprep.subr.bf16.mxu0 0
        %683 = vmatpush1.bf16.msra.mxu0 0
        %684 = vmatprep.subr.bf16.mxu0 0
        %685 = vmatpush1.bf16.msra.mxu0 0
        %686 = vmatprep.subr.bf16.mxu0 0
        %687 = vmatpush1.bf16.msra.mxu0 0
        %688 = vmatprep.subr.bf16.mxu0 0
        %689 = vmatpush1.bf16.msra.mxu0 0
        %690 = vmatprep.subr.bf16.mxu0 0
        %691 = vmatpush1.bf16.msra.mxu0 0
        %692 = vmatprep.subr.bf16.mxu0 0
        %693 = vmatpush1.bf16.msra.mxu0 0
        %694 = vmatprep.subr.bf16.mxu0 0
        %695 = vmatpush1.bf16.msra.mxu0 0
        %696 = vmatprep.mubr.bf16.mxu0 0
        %697 = vmatmul.mubr.bf16.gmra.mrb[0].mxu0 %v653
        %v698 = vpop.f32.mrb[0].mxu0
        %v699 = vadd.f32 0.0, %v698
        %v700 = vpop.f32.mrb[0].mxu0
        %v701 = vadd.f32 0.0, %v700
        %v702 = vpop.f32.mrb[0].mxu0
        %v703 = vadd.f32 0.0, %v702
        %v704 = vpop.f32.mrb[0].mxu0
        %v705 = vadd.f32 0.0, %v704
        %706 = vmatprep.mubr.bf16.mxu0 0
        %707 = vmatmul.mubr.bf16.gmra.mrb[0].mxu0 %v656
        %v708 = vpop.f32.mrb[0].mxu0
        %v709 = vadd.f32 0.0, %v708
        %v710 = vpop.f32.mrb[0].mxu0
        %v711 = vadd.f32 0.0, %v710
        %v712 = vpop.f32.mrb[0].mxu0
        %v713 = vadd.f32 0.0, %v712
        %v714 = vpop.f32.mrb[0].mxu0
        %v715 = vadd.f32 0.0, %v714
        %716 = vmatprep.mubr.bf16.mxu0 0
        %717 = vmatmul.mubr.bf16.gmra.mrb[0].mxu0 %v659
        %v718 = vpop.f32.mrb[0].mxu0
        %v719 = vadd.f32 0.0, %v718
        %v720 = vpop.f32.mrb[0].mxu0
        %v721 = vadd.f32 0.0, %v720
        %v722 = vpop.f32.mrb[0].mxu0
        %v723 = vadd.f32 0.0, %v722
        %v724 = vpop.f32.mrb[0].mxu0
        %v725 = vadd.f32 0.0, %v724
        %726 = vmatprep.mubr.bf16.mxu0 0
        %727 = vmatmul.mubr.bf16.gmra.mrb[0].mxu0 %v662
        %v728 = vpop.f32.mrb[0].mxu0
        %v729 = vadd.f32 0.0, %v728
        %v730 = vpop.f32.mrb[0].mxu0
        %v731 = vadd.f32 0.0, %v730
        %v732 = vpop.f32.mrb[0].mxu0
        %v733 = vadd.f32 0.0, %v732
        %v734 = vpop.f32.mrb[0].mxu0
        %v735 = vadd.f32 0.0, %v734
        %736 = vdwg.mxu0
        %v737 = vmax.f32 %v699, %v709
        %v738 = vmax.f32 %v703, %v713
        %v739 = vmax.f32 %v737, %v719
        %v740 = vmax.f32 %v738, %v723
        %v741 = vmax.f32 %v739, %v729
        %v742 = vmax.f32 %v740, %v733
        %v743 = vmax.f32 %v741, %v742
        %v744 = vrot.slane %v743, 4
        %v745 = vmax.f32 %v743, %v744
        %v746 = vrot.slane %v745, 2
        %v747 = vmax.f32 %v745, %v746
        %v748 = vrot.slane %v747, 1
        %v749 = vmax.f32 %v747, %v748
        %v750 = vmax.f32 %v701, %v711
        %v751 = vmax.f32 %v705, %v715
        %v752 = vmax.f32 %v750, %v721
        %v753 = vmax.f32 %v751, %v725
        %v754 = vmax.f32 %v752, %v731
        %v755 = vmax.f32 %v753, %v735
        %v756 = vmax.f32 %v754, %v755
        %v757 = vrot.slane %v756, 4
        %v758 = vmax.f32 %v756, %v757
        %v759 = vrot.slane %v758, 2
        %v760 = vmax.f32 %v758, %v759
        %v761 = vrot.slane %v760, 1
        %v762 = vmax.f32 %v760, %v761
        %v763 = vsub.f32 %v699, %v749
        %v764 = vsub.f32 %v701, %v762
        %v765 = vsub.f32 %v703, %v749
        %v766 = vsub.f32 %v705, %v762
        %v767 = vsub.f32 %v709, %v749
        %v768 = vsub.f32 %v711, %v762
        %v769 = vsub.f32 %v713, %v749
        %v770 = vsub.f32 %v715, %v762
        %v771 = vsub.f32 %v719, %v749
        %v772 = vsub.f32 %v721, %v762
        %v773 = vsub.f32 %v723, %v749
        %v774 = vsub.f32 %v725, %v762
        %v775 = vsub.f32 %v729, %v749
        %v776 = vsub.f32 %v731, %v762
        %v777 = vsub.f32 %v733, %v749
        %v778 = vsub.f32 %v735, %v762
        %v779 = vmul.f32 %v763, 1.442695
        %v780 = vpow.pop %v779
        %v781 = vmul.f32 %v764, 1.442695
        %v782 = vpow.pop %v781
        %v783 = vmul.f32 %v765, 1.442695
        %v784 = vpow.pop %v783
        %v785 = vmul.f32 %v766, 1.442695
        %v786 = vpow.pop %v785
        %v787 = vmul.f32 %v767, 1.442695
        %v788 = vpow.pop %v787
        %v789 = vmul.f32 %v768, 1.442695
        %v790 = vpow.pop %v789
        %v791 = vmul.f32 %v769, 1.442695
        %v792 = vpow.pop %v791
        %v793 = vmul.f32 %v770, 1.442695
        %v794 = vpow.pop %v793
        %v795 = vmul.f32 %v771, 1.442695
        %v796 = vpow.pop %v795
        %v797 = vmul.f32 %v772, 1.442695
        %v798 = vpow.pop %v797
        %v799 = vmul.f32 %v773, 1.442695
        %v800 = vpow.pop %v799
        %v801 = vmul.f32 %v774, 1.442695
        %v802 = vpow.pop %v801
        %v803 = vmul.f32 %v775, 1.442695
        %v804 = vpow.pop %v803
        %v805 = vmul.f32 %v776, 1.442695
        %v806 = vpow.pop %v805
        %v807 = vmul.f32 %v777, 1.442695
        %v808 = vpow.pop %v807
        %v809 = vmul.f32 %v778, 1.442695
        %v810 = vpow.pop %v809
        %v811 = vadd.f32 %v780, %v784
        %v812 = vadd.f32 %v811, %v788
        %v813 = vadd.f32 %v812, %v792
        %v814 = vadd.f32 %v813, %v796
        %v815 = vadd.f32 %v814, %v800
        %v816 = vadd.f32 %v815, %v804
        %v817 = vadd.f32 %v816, %v808
        %v818 = vrot.slane %v817, 4
        %v819 = vadd.f32 %v817, %v818
        %v820 = vrot.slane %v819, 2
        %v821 = vadd.f32 %v819, %v820
        %v822 = vrot.slane %v821, 1
        %v823 = vadd.f32 %v821, %v822
        %v824 = vadd.f32 %v782, %v786
        %v825 = vadd.f32 %v824, %v790
        %v826 = vadd.f32 %v825, %v794
        %v827 = vadd.f32 %v826, %v798
        %v828 = vadd.f32 %v827, %v802
        %v829 = vadd.f32 %v828, %v806
        %v830 = vadd.f32 %v829, %v810
        %v831 = vrot.slane %v830, 4
        %v832 = vadd.f32 %v830, %v831
        %v833 = vrot.slane %v832, 2
        %v834 = vadd.f32 %v832, %v833
        %v835 = vrot.slane %v834, 1
        %v836 = vadd.f32 %v834, %v835
        %v837 = vld [vmem:[#allocation3] sm:$0xf]
        %v838 = vpack.c.bf16 %v784, %v780
        %v839 = vpack.c.bf16 %v786, %v782
        %v840 = vpack.c.bf16 %v792, %v788
        %v841 = vpack.c.bf16 %v794, %v790
        %v842 = vpack.c.bf16 %v800, %v796
        %v843 = vpack.c.bf16 %v802, %v798
        %v844 = vpack.c.bf16 %v808, %v804
        %v845 = vpack.c.bf16 %v810, %v806
        %vm846 = vcmask 523264
        %v848 = vsel %vm846, %v837, 0
        %850 = vmatprep.subr.bf16.mxu0 %v839
        %851 = vmatpush1.bf16.msra.mxu0 %v838
        %852 = vmatprep.subr.bf16.mxu0 %v841
        %853 = vmatpush1.bf16.msra.mxu0 %v840
        %854 = vmatprep.subr.bf16.mxu0 %v843
        %855 = vmatpush1.bf16.msra.mxu0 %v842
        %856 = vmatprep.subr.bf16.mxu0 %v845
        %857 = vmatpush1.bf16.msra.mxu0 %v844
        %858 = vmatprep.subr.bf16.mxu0 0
        %859 = vmatpush1.bf16.msra.mxu0 0
        %860 = vmatprep.subr.bf16.mxu0 0
        %861 = vmatpush1.bf16.msra.mxu0 0
        %862 = vmatprep.subr.bf16.mxu0 0
        %863 = vmatpush1.bf16.msra.mxu0 0
        %864 = vmatprep.subr.bf16.mxu0 0
        %865 = vmatpush1.bf16.msra.mxu0 0
        %866 = vmatprep.subr.bf16.mxu0 0
        %867 = vmatpush1.bf16.msra.mxu0 0
        %868 = vmatprep.subr.bf16.mxu0 0
        %869 = vmatpush1.bf16.msra.mxu0 0
        %870 = vmatprep.subr.bf16.mxu0 0
        %871 = vmatpush1.bf16.msra.mxu0 0
        %872 = vmatprep.subr.bf16.mxu0 0
        %873 = vmatpush1.bf16.msra.mxu0 0
        %874 = vmatprep.subr.bf16.mxu0 0
        %875 = vmatpush1.bf16.msra.mxu0 0
        %876 = vmatprep.subr.bf16.mxu0 0
        %877 = vmatpush1.bf16.msra.mxu0 0
        %878 = vmatprep.subr.bf16.mxu0 0
        %879 = vmatpush1.bf16.msra.mxu0 0
        %880 = vmatprep.subr.bf16.mxu0 0
        %881 = vmatpush1.bf16.msra.mxu0 0
        %882 = vmatprep.mubr.bf16.mxu0 0
        %883 = vmatmul.mubr.bf16.gmra.mrb[0].mxu0 %v848
        %v884 = vpop.f32.mrb[0].mxu0
        %v885 = vadd.f32 0.0, %v884
        %v886 = vpop.f32.mrb[0].mxu0
        %v887 = vadd.f32 0.0, %v886
        %v888 = vpop.f32.mrb[0].mxu0
        %v889 = vpop.f32.mrb[0].mxu0
        %890 = vdwg.mxu0
        %v891 = vrcp.pop %v823
        %v892 = vrcp.pop %v836
        %v893 = vmul.f32 %v885, %v891
        %v894 = vmul.f32 %v887, %v892
        %895 = vst [vmem:[%s336] sm:$0xff] %v893
        %896 = vst [vmem:[%s336 + $0x8] sm:$0xff] %v894
        %s897 = sand.u32 %s224, 1
        %s898 = scalar_lea.sflag [#allocation5], %s897
        %s899 = sand.u32 %s224, 1
        %s900 = smul.addr %s899, 16
        %s901 = scalar_lea.vmem [#allocation4], %s900
        // Predicated region
        $region57: #{tpu_custom_call.1} parent=51 // pred_check
          %p902 = pneg %p234
        $region58: #{tpu_custom_call.1} parent=51 // pred_check_branch
          %904 = sbr.rel (%p902) target = $region60
        $region59: #{tpu_custom_call.1} parent=51 // pred_region
          %s905 = smul.u32 2, %s27
          %s907 = ssub.s32 256, 256
          %908 = vsyncadd %s898, %s907
          %s909 = smul.addr %s26, 2
          %s910 = sadd.s32 %s905, %s909
          %s911 = smul.addr %s910, 128
          %s912 = scalar_lea.hbm %s8, %s911
          %s914 = sshll.u32 %s901, 4
          %s915 = int_to_ptr.vmem [resolvable:$true] %s914
          %917 = dma.vmem_to_hbm [thread:$0]  %s915, 256, %s912, %s898
        $region60: #{tpu_custom_call.1} parent=51 // pred_fallthru
          _
      $region52: #{tpu_custom_call.1} parent=5 // pred_fallthru
        _
      %p918 = scmp.le.s32.totalorder 2, %s17
      // Predicated region
      $region61: #{tpu_custom_call.1} parent=5 // pred_check
        %p919 = pneg %p918
      $region62: #{tpu_custom_call.1} parent=5 // pred_check_branch
        %921 = sbr.rel (%p919) target = $region64
      $region63: #{tpu_custom_call.1} parent=5 // pred_region
        %s922 = ssub.s32 %s17, 2
        // Predicated region
        $region65: #{tpu_custom_call.1} parent=63 // pred_check
          %p923 = pneg %p240
        $region66: #{tpu_custom_call.1} parent=63 // pred_check_branch
          %925 = sbr.rel (%p923) target = $region68
        $region67: #{tpu_custom_call.1} parent=63 // pred_region
          %s926 = sand.u32 %s225, 1
          %s927 = scalar_lea.sflag [#allocation5], %s926
          %s928 = sand.u32 %s225, 1
          %s929 = smul.addr %s928, 16
          %s930 = scalar_lea.vmem [#allocation4], %s929
          %931 = dma.done %s927, 256
        $region68: #{tpu_custom_call.1} parent=63 // pred_fallthru
          _
      $region64: #{tpu_custom_call.1} parent=5 // pred_fallthru
        _
    $region6: #{tpu_custom_call.1} parent=1 // loop_footer
      %s21 = sadd.s32 1, %s17
    $region7: #{tpu_custom_call.1} parent=1 // loop_footer_branch
      %16 = sbr.rel target = $region3
    $region8: #{tpu_custom_call.1} parent=1 // loop_exit
      _
    %932 = vsyncpa [#allocation5], 1
    %s933 = scalar_lea.sflag [#allocation5], 1
    %934 = vsyncpa %s933, 1

</llo_original>
